<compile_context>
chip_gen: v7x
topology: tpu7x:2x2x1
jax: 0.10.0
libtpu: 0.0.40
codegen_flags: <defaults>
</compile_context>

<pallas_src>
import jax
import jax.numpy as jnp
from jax import lax
from jax.experimental import pallas as pl
from jax.experimental.pallas import tpu as pltpu

LANE = 128
MIN_TILE = 512   # review: <512-lane tiles fall well off the HBM roofline


def _vmem_capacity_bytes():
    try:
        return int(pltpu.get_tpu_info().vmem_capacity_bytes)
    except Exception:
        return 64 << 20   # conservative default (v7x per-TC VMEM)


# ----------------------------------------------------------------------------
# Pallas kernel: fused 1x1 conv on NCHW data, HW in the lane dimension.
# ----------------------------------------------------------------------------
def _make_conv1x1_kernel(has_pre, has_post, has_res):
    """Ref order: x, [res], w, b, [pre_s, pre_t], [post_s, post_t], out.

    pre_*  : folded inference BatchNorm + ReLU applied to x before the conv.
    post_* : the *next* layer's folded BatchNorm + ReLU applied to the conv
             output in the epilogue.
    res    : residual tensor added before the store.
    BN/ReLU math runs in f32 (v5e VPU has no bf16); matmul operands are cast
    to the weight dtype (bf16 fast path) with an f32 MXU accumulate.
    """
    def kernel(*refs):
        i = 0
        x_ref = refs[i]; i += 1
        res_ref = None
        if has_res:
            res_ref = refs[i]; i += 1
        w_ref = refs[i]; i += 1
        b_ref = refs[i]; i += 1
        if has_pre:
            pre_s_ref, pre_t_ref = refs[i], refs[i + 1]; i += 2
        if has_post:
            post_s_ref, post_t_ref = refs[i], refs[i + 1]; i += 2
        o_ref = refs[-1]

        x = x_ref[...]
        if has_pre:
            x = jnp.maximum(x.astype(jnp.float32) * pre_s_ref[...]
                            + pre_t_ref[...], 0.0)
        # (Cout, Cin) @ (Cin, T): lhs contraction on lanes, rhs contraction on
        # sublanes -> no per-grid-step transpose feeding the MXU.
        acc = jnp.dot(w_ref[...], x.astype(w_ref.dtype),
                      preferred_element_type=jnp.float32)
        acc = acc + b_ref[...]
        if has_post:
            acc = jnp.maximum(acc * post_s_ref[...] + post_t_ref[...], 0.0)
        if has_res:
            acc = acc + res_ref[...].astype(jnp.float32)
        o_ref[...] = acc.astype(o_ref.dtype)

    return kernel


def _pick_tile_hw(hw, per_lane_bytes, budget_bytes):
    """Largest multiple-of-128 tile dividing hw that fits the VMEM budget.
    Never shrinks below MIN_TILE just to create grid steps (we left 25% VMEM
    headroom, so preferring MIN_TILE over the strict budget is safe)."""
    max_tile = (budget_bytes // per_lane_bytes) // LANE * LANE
    max_tile = max(max_tile, min(MIN_TILE, hw))
    tile = min(max_tile, hw)
    while hw % tile != 0:          # terminates at LANE since hw % LANE == 0
        tile -= LANE
    return tile


def conv1x1_nchw(x, weight, bias, *, pre_scale=None, pre_shift=None,
                 post_scale=None, post_shift=None, residual=None):
    """out = [relu(post*(.)+..)]( conv1x1( [relu(pre*x+..)] ) + b ) [+ residual]

    x        : (N, Cin, H, W) activations (f32 or bf16 in HBM)
    weight   : (Cout, Cin, 1, 1) torch-style conv weight
    bias     : (Cout,)
    pre_*    : optional (Cin,)  folded inference BN (+ReLU) before the conv
    post_*   : optional (Cout,) next layer's folded BN (+ReLU), fused epilogue
    residual : optional (N, Cout, H, W) added before the store
    """
    N, Cin, H, W = x.shape
    Cout = weight.shape[0]
    HW = H * W
    act_dtype = x.dtype
    act_is = jnp.dtype(act_dtype).itemsize

    has_pre = pre_scale is not None
    has_post = post_scale is not None
    has_res = residual is not None

    # ---- VMEM budget / tile selection --------------------------------------
    cap = _vmem_capacity_bytes()
    vmem_limit = min(cap // 2, 64 << 20)       # 64 MiB v5e/v6e, 32 MiB v7x
    w_bytes = Cout * Cin * act_is
    vec_bytes = (Cout + (2 * Cin if has_pre else 0)
                 + (2 * Cout if has_post else 0)) * 4
    fixed = 2 * (w_bytes + vec_bytes)          # double-buffered resident blocks
    per_lane = 2 * (Cin + Cout + (Cout if has_res else 0)) * act_is
    budget = max(int(vmem_limit * 0.75) - fixed, per_lane * LANE)

    pad = 0
    if HW % LANE != 0:
        if per_lane * HW > budget:             # full-extent tile won't fit
            pad = (-HW) % LANE
            tile = _pick_tile_hw(HW + pad, per_lane, budget)
        else:
            tile = HW                          # full extent: (8,128)-exempt
    else:
        tile = _pick_tile_hw(HW, per_lane, budget)
    HWp = HW + pad

    # ---- operands / specs ---------------------------------------------------
    x3 = x.reshape(N, Cin, HW)
    if pad:
        x3 = jnp.pad(x3, ((0, 0), (0, 0), (0, pad)))
    w2 = weight.reshape(Cout, Cin).astype(act_dtype)   # bf16 weights, fast path
    b2 = bias.reshape(Cout, 1).astype(jnp.float32)

    operands = [x3]
    in_specs = [pl.BlockSpec((None, Cin, tile), lambda n, j: (n, 0, j))]
    if has_res:
        r3 = residual.reshape(N, Cout, HW)
        if pad:
            r3 = jnp.pad(r3, ((0, 0), (0, 0), (0, pad)))
        operands.append(r3)
        in_specs.append(pl.BlockSpec((None, Cout, tile), lambda n, j: (n, 0, j)))
    operands += [w2, b2]
    in_specs += [pl.BlockSpec((Cout, Cin), lambda n, j: (0, 0)),
                 pl.BlockSpec((Cout, 1), lambda n, j: (0, 0))]
    if has_pre:
        operands += [pre_scale.reshape(Cin, 1).astype(jnp.float32),
                     pre_shift.reshape(Cin, 1).astype(jnp.float32)]
        in_specs += [pl.BlockSpec((Cin, 1), lambda n, j: (0, 0))] * 2
    if has_post:
        operands += [post_scale.reshape(Cout, 1).astype(jnp.float32),
                     post_shift.reshape(Cout, 1).astype(jnp.float32)]
        in_specs += [pl.BlockSpec((Cout, 1), lambda n, j: (0, 0))] * 2

    o_spec = pl.BlockSpec((None, Cout, tile), lambda n, j: (n, 0, j))
    grid = (N, HWp // tile)

    res_bytes = N * HW * Cout * act_is if has_res else 0
    cost = pl.CostEstimate(
        flops=2 * N * HW * Cin * Cout,
        transcendentals=0,
        bytes_accessed=int(N * HW * (Cin + Cout) * act_is + res_bytes
                           + w_bytes + vec_bytes * 4),
    )
    cparams = pltpu.CompilerParams(
        # Both axes are independent; "parallel" lets v7x's two TensorCores
        # split the (N, HW-tiles) grid.  v5e/v6e have one TC -> no-op there.
        dimension_semantics=("parallel", "parallel"),
        vmem_limit_bytes=int(vmem_limit),
    )

    out = pl.pallas_call(
        _make_conv1x1_kernel(has_pre, has_post, has_res),
        out_shape=jax.ShapeDtypeStruct((N, Cout, HWp), act_dtype),
        grid_spec=pltpu.PrefetchScalarGridSpec(
            num_scalar_prefetch=0, grid=grid,
            in_specs=in_specs, out_specs=o_spec),
        compiler_params=cparams,
        cost_estimate=cost,
    )(*operands)
    if pad:
        out = out[:, :, :HW]
    return out.reshape(N, Cout, H, W)


# ----------------------------------------------------------------------------
# Pure-JAX reference / non-Pallas helpers.
# ----------------------------------------------------------------------------
def _conv1x1_ref(x, weight, bias, pre_scale=None, pre_shift=None):
    Cout, Cin = weight.shape[0], weight.shape[1]
    if pre_scale is not None:
        x = jnp.maximum(x * pre_scale.reshape(1, Cin, 1, 1)
                        + pre_shift.reshape(1, Cin, 1, 1), 0.0)
    y = jnp.einsum("nchw,oc->nohw", x, weight.reshape(Cout, Cin),
                   precision=lax.Precision.HIGHEST)
    return y + bias.reshape(1, Cout, 1, 1)


def _conv2d_xla(x, weight, bias, stride, padding):
    # TODO(synk): KxK conv (halo across spatial tiles) left to XLA's conv.
    y = lax.conv_general_dilated(
        x, weight.astype(x.dtype), window_strides=(stride, stride),
        padding=[(padding, padding), (padding, padding)],
        dimension_numbers=("NCHW", "OIHW", "NCHW"),
        preferred_element_type=jnp.float32)
    return (y + bias.reshape(1, -1, 1, 1)).astype(x.dtype)


def _max_pool_2x2(x):
    # TODO(synk): 2x2/2 max-pool (pure data movement) left to XLA; for even
    # H, W this reshape+max is exactly MaxPool2d((2,2),(2,2)).
    n, c, h, w = x.shape
    return x.reshape(n, c, h // 2, 2, w // 2, 2).max(axis=(3, 5))


def _upsample2x(x):
    # TODO(synk): nearest 2x upsample (myUpsample) left to XLA broadcast.
    n, c, h, w = x.shape
    x = jnp.broadcast_to(x[:, :, :, None, :, None], (n, c, h, 2, w, 2))
    return x.reshape(n, c, 2 * h, 2 * w)


def _fold_bn(bn):
    scale = bn["gamma"] * lax.rsqrt(bn["var"] + bn["eps"])
    shift = bn["beta"] - bn["mean"] * scale
    return scale, shift


# ----------------------------------------------------------------------------
# Module forwards (mirroring the PyTorch structure, inference-mode BN).
# ----------------------------------------------------------------------------
def skip_layer_forward(p, x, use_pallas=True):
    if p is None:                      # inChannels == outChannels -> identity
        return x
    if use_pallas:
        return conv1x1_nchw(x, p["w"], p["b"])
    return _conv1x1_ref(x, p["w"], p["b"])


def residual_forward(p, x, use_pallas=True):
    cb = p["cb"]
    s1, t1 = _fold_bn(cb["cbr1"]["bn"])
    s2, t2 = _fold_bn(cb["cbr2"]["bn"])
    s3, t3 = _fold_bn(cb["cbr3"]["bn"])
    w1, b1 = cb["cbr1"]["conv"]["w"], cb["cbr1"]["conv"]["b"]
    w2, b2 = cb["cbr2"]["conv"]["w"], cb["cbr2"]["conv"]["b"]
    w3, b3 = cb["cbr3"]["conv"]["w"], cb["cbr3"]["conv"]["b"]
    st2, pd2 = cb["cbr2"]["stride"], cb["cbr2"]["padding"]

    if not use_pallas:
        y = _conv1x1_ref(x, w1, b1, s1, t1)
        y = jnp.maximum(y * s2.reshape(1, -1, 1, 1)
                        + t2.reshape(1, -1, 1, 1), 0.0)
        y = _conv2d_xla(y, w2, b2, st2, pd2)
        y = _conv1x1_ref(y, w3, b3, s3, t3)
        skip = x if p["skip"] is None else _conv1x1_ref(x, p["skip"]["w"],
                                                        p["skip"]["b"])
        return y + skip

    # Skip branch: identity in the Hourglass; 1x1 Pallas conv otherwise.
    skip = x if p["skip"] is None else conv1x1_nchw(x, p["skip"]["w"],
                                                    p["skip"]["b"])
    # K1: BN1+ReLU -> 1x1 conv -> next layer's BN2+ReLU (one HBM pass).
    y = conv1x1_nchw(x, w1, b1, pre_scale=s1, pre_shift=t1,
                     post_scale=s2, post_shift=t2)
    # 3x3 conv in XLA (its BN/ReLU prologue already applied by K1's epilogue).
    y = _conv2d_xla(y, w2, b2, st2, pd2)
    # K3: BN3+ReLU -> 1x1 conv -> + skip (residual add fused, one HBM pass).
    return conv1x1_nchw(y, w3, b3, pre_scale=s3, pre_shift=t3, residual=skip)


def _hourglass(params, x, use_pallas):
    out1 = x
    for p in params["skip"]:
        out1 = residual_forward(p, out1, use_pallas)
    out2 = _max_pool_2x2(x)
    for p in params["afterpool"]:
        out2 = residual_forward(p, out2, use_pallas)
    if params["hg"] is not None:
        out2 = _hourglass(params["hg"], out2, use_pallas)
    else:
        for p in params["num1res"]:
            out2 = residual_forward(p, out2, use_pallas)
    for p in params["lowres"]:
        out2 = residual_forward(p, out2, use_pallas)
    out2 = _upsample2x(out2)
    return out2 + out1


def hourglass_forward(params, x, use_pallas=True, compute_dtype=jnp.bfloat16):
    """Hourglass.forward.  The fast path runs activations in bf16 end-to-end
    (halves HBM traffic for the mem-bound 1x1 convs) with f32 accumulation in
    every matmul; pass compute_dtype=jnp.float32 for a bit-accurate path."""
    out = _hourglass(params, x.astype(compute_dtype), use_pallas)
    return out.astype(x.dtype)


# ----------------------------------------------------------------------------
# Deterministic synthetic parameter initialisation.
# ----------------------------------------------------------------------------
def _init_conv(key, cin, cout, ksize, dtype=jnp.float32):
    kw, kb = jax.random.split(key)
    bound = 1.0 / float(cin * ksize * ksize) ** 0.5
    return {
        "w": jax.random.uniform(kw, (cout, cin, ksize, ksize), dtype, -bound, bound),
        "b": jax.random.uniform(kb, (cout,), dtype, -bound, bound),
    }


def _init_bn(key, c, dtype=jnp.float32):
    kg, kb, km, kv = jax.random.split(key, 4)
    return {
        "gamma": jax.random.uniform(kg, (c,), dtype, 0.5, 1.5),
        "beta": jax.random.normal(kb, (c,), dtype) * 0.1,
        "mean": jax.random.normal(km, (c,), dtype) * 0.1,
        "var": jax.random.uniform(kv, (c,), dtype, 0.5, 1.5),
        "eps": 1e-5,
    }


def _init_bn_relu_conv(key, cin, cout, ksize, stride, padding):
    k1, k2 = jax.random.split(key)
    return {"bn": _init_bn(k1, cin), "conv": _init_conv(k2, cin, cout, ksize),
            "kernel_size": ksize, "stride": stride, "padding": padding}


def _init_conv_block(key, cin, cout):
    c2 = cout // 2
    k1, k2, k3 = jax.random.split(key, 3)
    return {"cbr1": _init_bn_relu_conv(k1, cin, c2, 1, 1, 0),
            "cbr2": _init_bn_relu_conv(k2, c2, c2, 3, 1, 1),
            "cbr3": _init_bn_relu_conv(k3, c2, cout, 1, 1, 0)}


def _init_residual(key, cin, cout):
    k1, k2 = jax.random.split(key)
    skip = None if cin == cout else _init_conv(k2, cin, cout, 1)
    return {"cb": _init_conv_block(k1, cin, cout), "skip": skip}


def init_hourglass_params(key, n_channels, num_reductions, n_modules):
    ks = jax.random.split(key, 5)

    def res_seq(k):
        return [_init_residual(kk, n_channels, n_channels)
                for kk in jax.random.split(k, n_modules)]

    params = {"skip": res_seq(ks[0]), "afterpool": res_seq(ks[1]),
              "lowres": res_seq(ks[2])}
    if num_reductions > 1:
        params["hg"] = init_hourglass_params(ks[3], n_channels,
                                             num_reductions - 1, n_modules)
        params["num1res"] = None
    else:
        params["hg"] = None
        params["num1res"] = res_seq(ks[4])
    return params


# ----------------------------------------------------------------------------
if __name__ == "__main__":
    key = jax.random.PRNGKey(0)
    k_x, k_p, k_w, k_r = jax.random.split(key, 4)

    # --- 1) SkipLayer 1x1 conv with inChannels != outChannels (f32 path).
    N, Cin, H, W = 2, 8, 16, 16
    Cout = 16
    x = jax.random.normal(k_x, (N, Cin, H, W), jnp.float32)
    skip_p = _init_conv(k_w, Cin, Cout, 1)
    y = jax.block_until_ready(skip_layer_forward(skip_p, x, use_pallas=True))
    y_ref = skip_layer_forward(skip_p, x, use_pallas=False)
    assert y.shape == (N, Cout, H, W)
    assert jnp.allclose(y, y_ref, atol=1e-2, rtol=1e-2), "skip 1x1 conv mismatch"

    # inChannels == outChannels -> identity (no kernel launched)
    assert skip_layer_forward(None, x, use_pallas=True) is x

    # --- 2) Fused Residual module (BN prologue + BN epilogue + residual add).
    res_p = _init_residual(k_r, Cin, Cout)          # conv skip path exercised
    r = jax.block_until_ready(residual_forward(res_p, x, use_pallas=True))
    r_ref = residual_forward(res_p, x, use_pallas=False)
    assert r.shape == (N, Cout, H, W)
    assert jnp.allclose(r, r_ref, atol=2e-2, rtol=2e-2), "residual mismatch"

    # --- 3) Full Hourglass forward (small config), bf16 fast path.
    nChannels, numReductions, nModules = 16, 2, 1
    xh = jax.random.normal(k_x, (2, nChannels, 16, 16), jnp.float32)
    params = init_hourglass_params(k_p, nChannels, numReductions, nModules)

    hg_pallas = jax.jit(lambda inp: hourglass_forward(
        params, inp, use_pallas=True, compute_dtype=jnp.bfloat16))
    out = jax.block_until_ready(hg_pallas(xh))
    ref = hourglass_forward(params, xh, use_pallas=False,
                            compute_dtype=jnp.float32)
    assert out.shape == xh.shape
    denom = float(jnp.max(jnp.abs(ref))) + 1e-6
    rel = float(jnp.max(jnp.abs(out - ref))) / denom
    assert rel < 0.08, f"hourglass mismatch (rel={rel:.4f})"

    print("KERNEL_OK")
</pallas_src>

<mosaic_0001>
module attributes {stable_mosaic.version = 11 : i64} {
  func.func @kernel(%arg0: i32, %arg1: i32, %arg2: memref<1x8x256xf32, #tpu.memory_space<vmem>>, %arg3: memref<16x8xf32, #tpu.memory_space<vmem>>, %arg4: memref<16x1xf32, #tpu.memory_space<vmem>>, %arg5: memref<1x16x256xf32, #tpu.memory_space<vmem>>) attributes {dimension_semantics = [#tpu.dimension_semantics<parallel>, #tpu.dimension_semantics<parallel>], iteration_bounds = array<i64: 2, 1>, scalar_prefetch = 0 : i64, scratch_operands = 0 : i64, tpu.core_type = #tpu.core_type<tc>, window_params = [{transform_indices = @transform_0, window_bounds = array<i64: 1, 8, 256>}, {pipeline_mode = #tpu.pipeline_mode<synchronous>, transform_indices = @transform_1, window_bounds = array<i64: 16, 8>}, {pipeline_mode = #tpu.pipeline_mode<synchronous>, transform_indices = @transform_2, window_bounds = array<i64: 16, 1>}, {transform_indices = @transform_3, window_bounds = array<i64: 1, 16, 256>}]} {
    %c0 = arith.constant 0 : index
    %c0_0 = arith.constant 0 : index
    %c0_1 = arith.constant 0 : index
    %0 = vector.load %arg2[%c0, %c0_0, %c0_1] : memref<1x8x256xf32, #tpu.memory_space<vmem>>, vector<1x8x256xf32>
    %1 = vector.shape_cast %0 : vector<1x8x256xf32> to vector<8x256xf32>
    %c0_2 = arith.constant 0 : index
    %c0_3 = arith.constant 0 : index
    %2 = vector.load %arg3[%c0_2, %c0_3] : memref<16x8xf32, #tpu.memory_space<vmem>>, vector<16x8xf32>
    %cst = arith.constant dense<0.000000e+00> : vector<16x256xf32>
    %3 = tpu.matmul %2, %1, %cst {dimension_numbers = #tpu.dot_dimension_numbers<[1], [0], [0], [1], [0, 0, 1, 1], [], []>} : vector<16x8xf32>, vector<8x256xf32>, vector<16x256xf32> -> vector<16x256xf32>
    %c0_4 = arith.constant 0 : index
    %c0_5 = arith.constant 0 : index
    %4 = vector.load %arg4[%c0_4, %c0_5] : memref<16x1xf32, #tpu.memory_space<vmem>>, vector<16x1xf32>
    %5 = vector.broadcast %4 : vector<16x1xf32> to vector<16x256xf32>
    %6 = arith.addf %3, %5 : vector<16x256xf32>
    %c0_6 = arith.constant 0 : index
    %c0_7 = arith.constant 0 : index
    %c0_8 = arith.constant 0 : index
    %7 = vector.load %arg5[%c0_6, %c0_7, %c0_8] : memref<1x16x256xf32, #tpu.memory_space<vmem>>, vector<1x16x256xf32>
    %8 = vector.shape_cast %7 : vector<1x16x256xf32> to vector<16x256xf32>
    %9 = vector.shape_cast %6 : vector<16x256xf32> to vector<1x16x256xf32>
    tpu.vector_store %arg5[%c0_6, %c0_7, %c0_8], %9 {strides = array<i32>} : memref<1x16x256xf32, #tpu.memory_space<vmem>>, vector<1x16x256xf32>,
    return
  }
  func.func @transform_0(%arg0: i32, %arg1: i32) -> (i32, i32, i32) {
    %c0_i32 = arith.constant 0 : i32
    %c0_i32_0 = arith.constant 0 : i32
    return %arg0, %c0_i32, %arg1 : i32, i32, i32
  }
  func.func @transform_1(%arg0: i32, %arg1: i32) -> (i32, i32) {
    %c0_i32 = arith.constant 0 : i32
    %c0_i32_0 = arith.constant 0 : i32
    %c0_i32_1 = arith.constant 0 : i32
    return %c0_i32, %c0_i32_0 : i32, i32
  }
  func.func @transform_2(%arg0: i32, %arg1: i32) -> (i32, i32) {
    %c0_i32 = arith.constant 0 : i32
    %c0_i32_0 = arith.constant 0 : i32
    %c0_i32_1 = arith.constant 0 : i32
    return %c0_i32, %c0_i32_0 : i32, i32
  }
  func.func @transform_3(%arg0: i32, %arg1: i32) -> (i32, i32, i32) {
    %c0_i32 = arith.constant 0 : i32
    %c0_i32_0 = arith.constant 0 : i32
    return %arg0, %c0_i32, %arg1 : i32, i32, i32
  }
}

</mosaic_0001>

<llo_original>
// kernel: tpu_custom_call.1
$region0: #{tpu_custom_call.1}
  #allocation0 [shape = 'u32[]', space=smem, size = 0x4, offset = 0x4, fixed_abs, tag = 'smem constant byte address 0x4 - core index']
  #allocation1 [shape = 'u32[144,128]{1,0:T(1,128)}', space=vmem, size = 0x12000, scoped, tag = 'internal scratch']
  %s0 = inlined_call_operand.vmem [shape: f32[2,8,256], index: 0, kind: input, shape index: {}]
  %s1 = inlined_call_operand.vmem [shape: f32[16,8], index: 1, kind: input, shape index: {}]
  %s2 = inlined_call_operand.vmem [shape: f32[16,1], index: 2, kind: input, shape index: {}]
  %s3 = inlined_call_operand.hbm [shape: f32[2,16,256], index: 3, kind: output, shape index: {}]
  %s4 = sld [smem:[#allocation0]]
  $region45: #{tpu_custom_call.1} parent=0
    _
  %s6 = ssub.s32 1, %s4
  %s7 = scalar_select 0, %s6, %s4
  $region1: #{tpu_custom_call.1} parent=0
    #allocation2 [shape = 'u8[32768]{0}', space=vmem, size = 0x8000, scoped, tag = 'output window, operand 0']
    #allocation3 [shape = 's32[2]{0}', space=sflag, size = 0x8, scoped, tag = 'scoped memory for tpu_custom_call.1']
    %8 = vsyncpa [#allocation3], 0
    %s9 = scalar_lea.sflag [#allocation3], 1
    %10 = vsyncpa %s9, 0
    loop: start=0, step=1, limit=4
    $region2: #{tpu_custom_call.1} parent=1 // loop_pre_header
      _
    $region3: #{tpu_custom_call.1} parent=1 // loop_header
      %s12 = sphi 0, %s16
      %p13 = scmp.ge.s32.totalorder %s12, 4
      %s19 = sphi 0, %s31
      %s20 = sphi 0, %s27
      %s21 = sphi 0, %s19
      %s22 = sphi 0, %s20
      %s23 = sphi 0, %s21
      %s24 = sphi 0, %s22
      %s36 = sphi 0, %s38
      %s39 = sphi 0, %s36
      %s40 = sphi 0, %s39
      %s56 = sphi 0, %s40
      %s60 = sphi 0, %s60
      %s62 = sphi 0, %s60
      %s63 = sphi 0, %s62
      %s77 = sphi 0, %s63
      %s81 = sphi 0, %s81
      %s83 = sphi 0, %s81
      %s84 = sphi 0, %s83
      %s98 = sphi 0, %s84
      %s106 = sphi 0, %s108
      %s109 = sphi 0, %s106
      %s110 = sphi 0, %s109
      %s126 = sphi 0, %s110
    $region4: #{tpu_custom_call.1} parent=1 // loop_header_branch
      %15 = sbr.rel (%p13) target = $region8
    $region5: #{tpu_custom_call.1} parent=1 // loop_body
      %s17 = ssub.s32 %s12, 1
      %s18 = ssub.s32 %s12, 2
      %s25 = sadd.s32 1, %s20
      %p26 = scmp.ge.s32.totalorder %s25, 1
      %s27 = scalar_select %p26, 0, %s25
      %s28 = sadd.s32 1, %s19
      %s29 = scalar_select %p26, %s28, %s19
      %p30 = scmp.ge.s32.totalorder %s29, 2
      %s31 = scalar_select %p30, 0, %s29
      %s32 = ssub.s32 %s19, %s31
      %s33 = ssub.s32 %s20, %s27
      %s34 = sor.u32 %s32, %s33
      %p35 = scmp.eq.s32.totalorder %s34, 0
      %s37 = sadd.s32 %s36, 1
      %s38 = scalar_select %p35, %s36, %s37
      %p41 = pneg %p35
      %p42 = scmp.eq.s32.totalorder %s12, 1
      %p43 = por %p41, %p42
      %p44 = scmp.ne.s32.totalorder %s36, %s39
      %p45 = scmp.eq.s32.totalorder %s12, 0
      %p46 = por %p44, %p45
      %p47 = scmp.ne.s32.totalorder %s36, %s39
      %p48 = scmp.eq.s32.totalorder %s17, 1
      %p49 = por %p47, %p48
      %p50 = scmp.ne.s32.totalorder %s39, %s40
      %p51 = scmp.eq.s32.totalorder %s17, 0
      %p52 = por %p50, %p51
      %p53 = scmp.ne.s32.totalorder %s39, %s40
      %p54 = scmp.eq.s32.totalorder %s18, 1
      %p55 = por %p53, %p54
      %p57 = scmp.ne.s32.totalorder %s40, %s56
      %p58 = scmp.eq.s32.totalorder %s18, 0
      %p59 = por %p57, %p58
      %s61 = sadd.s32 %s60, 1
      %p64 = scmp.eq.s32.totalorder %s12, 1
      %p65 = scmp.ne.s32.totalorder %s60, %s62
      %p66 = scmp.eq.s32.totalorder %s12, 0
      %p67 = por %p65, %p66
      %p68 = scmp.ne.s32.totalorder %s60, %s62
      %p69 = scmp.eq.s32.totalorder %s17, 1
      %p70 = por %p68, %p69
      %p71 = scmp.ne.s32.totalorder %s62, %s63
      %p72 = scmp.eq.s32.totalorder %s17, 0
      %p73 = por %p71, %p72
      %p74 = scmp.ne.s32.totalorder %s62, %s63
      %p75 = scmp.eq.s32.totalorder %s18, 1
      %p76 = por %p74, %p75
      %p78 = scmp.ne.s32.totalorder %s63, %s77
      %p79 = scmp.eq.s32.totalorder %s18, 0
      %p80 = por %p78, %p79
      %s82 = sadd.s32 %s81, 1
      %p85 = scmp.eq.s32.totalorder %s12, 1
      %p86 = scmp.ne.s32.totalorder %s81, %s83
      %p87 = scmp.eq.s32.totalorder %s12, 0
      %p88 = por %p86, %p87
      %p89 = scmp.ne.s32.totalorder %s81, %s83
      %p90 = scmp.eq.s32.totalorder %s17, 1
      %p91 = por %p89, %p90
      %p92 = scmp.ne.s32.totalorder %s83, %s84
      %p93 = scmp.eq.s32.totalorder %s17, 0
      %p94 = por %p92, %p93
      %p95 = scmp.ne.s32.totalorder %s83, %s84
      %p96 = scmp.eq.s32.totalorder %s18, 1
      %p97 = por %p95, %p96
      %p99 = scmp.ne.s32.totalorder %s84, %s98
      %p100 = scmp.eq.s32.totalorder %s18, 0
      %p101 = por %p99, %p100
      %s102 = ssub.s32 %s19, %s31
      %s103 = ssub.s32 %s20, %s27
      %s104 = sor.u32 %s102, %s103
      %p105 = scmp.eq.s32.totalorder %s104, 0
      %s107 = sadd.s32 %s106, 1
      %s108 = scalar_select %p105, %s106, %s107
      %p111 = pneg %p105
      %p112 = scmp.eq.s32.totalorder %s12, 1
      %p113 = por %p111, %p112
      %p114 = scmp.ne.s32.totalorder %s106, %s109
      %p115 = scmp.eq.s32.totalorder %s12, 0
      %p116 = por %p114, %p115
      %p117 = scmp.ne.s32.totalorder %s106, %s109
      %p118 = scmp.eq.s32.totalorder %s17, 1
      %p119 = por %p117, %p118
      %p120 = scmp.ne.s32.totalorder %s109, %s110
      %p121 = scmp.eq.s32.totalorder %s17, 0
      %p122 = por %p120, %p121
      %p123 = scmp.ne.s32.totalorder %s109, %s110
      %p124 = scmp.eq.s32.totalorder %s18, 1
      %p125 = por %p123, %p124
      %p127 = scmp.ne.s32.totalorder %s110, %s126
      %p128 = scmp.eq.s32.totalorder %s18, 0
      %p129 = por %p127, %p128
      %p130 = scmp.le.s32.totalorder 1, %s12
      %p131 = scmp.lt.s32.totalorder %s12, 3
      %p132 = pnand %p130, %p131
      %p133 = pneg %p132
      // Predicated region
      $region9: #{tpu_custom_call.1} parent=5 // pred_check
        _
      $region10: #{tpu_custom_call.1} parent=5 // pred_check_branch
        %135 = sbr.rel (%p132) target = $region12
      $region11: #{tpu_custom_call.1} parent=5 // pred_region
        %s136 = ssub.s32 %s12, 1
        // Predicated region
        $region13: #{tpu_custom_call.1} parent=11 // pred_check
          %p137 = pneg %p73
        $region14: #{tpu_custom_call.1} parent=11 // pred_check_branch
          %139 = sbr.rel (%p137) target = $region16
        $region15: #{tpu_custom_call.1} parent=11 // pred_region
          _
        $region16: #{tpu_custom_call.1} parent=11 // pred_fallthru
          _
        // Predicated region
        $region17: #{tpu_custom_call.1} parent=11 // pred_check
          %p140 = pneg %p94
        $region18: #{tpu_custom_call.1} parent=11 // pred_check_branch
          %142 = sbr.rel (%p140) target = $region20
        $region19: #{tpu_custom_call.1} parent=11 // pred_region
          _
        $region20: #{tpu_custom_call.1} parent=11 // pred_fallthru
          _
      $region12: #{tpu_custom_call.1} parent=5 // pred_fallthru
        _
      %p143 = scmp.lt.s32.totalorder %s12, 2
      // Predicated region
      $region21: #{tpu_custom_call.1} parent=5 // pred_check
        %p144 = pneg %p143
      $region22: #{tpu_custom_call.1} parent=5 // pred_check_branch
        %146 = sbr.rel (%p144) target = $region24
      $region23: #{tpu_custom_call.1} parent=5 // pred_region
        // Predicated region
        $region25: #{tpu_custom_call.1} parent=23 // pred_check
          %p147 = pneg %p46
        $region26: #{tpu_custom_call.1} parent=23 // pred_check_branch
          %149 = sbr.rel (%p147) target = $region28
        $region27: #{tpu_custom_call.1} parent=23 // pred_region
          %s150 = smul.u32 2, %s20
          %p151 = scmp.lt.s32.totalorder %s19, 1
          %s152 = scalar_select %p151, %s19, 1
          %p153 = scmp.lt.s32.totalorder %s150, 1
          %s154 = scalar_select %p153, %s150, 1
          %s155 = smul.addr %s152, 2
          %s156 = sadd.s32 %s154, %s155
          %s157 = smul.addr %s156, 8
          %s158 = scalar_lea.vmem %s0, %s157
          %s159 = smul.u32 2, %s20
        $region28: #{tpu_custom_call.1} parent=23 // pred_fallthru
          _
      $region24: #{tpu_custom_call.1} parent=5 // pred_fallthru
        _
      %p160 = scmp.le.s32.totalorder 1, %s12
      %p161 = scmp.lt.s32.totalorder %s12, 3
      %p162 = pnand %p160, %p161
      %p163 = pneg %p162
      // Predicated region
      $region29: #{tpu_custom_call.1} parent=5 // pred_check
        _
      $region30: #{tpu_custom_call.1} parent=5 // pred_check_branch
        %165 = sbr.rel (%p162) target = $region32
      $region31: #{tpu_custom_call.1} parent=5 // pred_region
        %s166 = ssub.s32 %s12, 1
        %s167 = smul.u32 2, %s22
        %p168 = scmp.lt.s32.totalorder %s21, 1
        %s169 = scalar_select %p168, %s21, 1
        %p170 = scmp.lt.s32.totalorder %s167, 1
        %s171 = scalar_select %p170, %s167, 1
        %s172 = smul.addr %s169, 2
        %s173 = sadd.s32 %s171, %s172
        %s174 = smul.addr %s173, 8
        %s175 = scalar_lea.vmem %s0, %s174
        %p176 = pneg %p52
        %p177 = pneg %p49
        %p178 = pneg %p73
        %p179 = pneg %p70
        %p180 = pneg %p94
        %p181 = pneg %p91
        %p182 = pneg %p122
        %p183 = pneg %p119
        %s184 = sand.u32 %s109, 1
        %s185 = scalar_lea.sflag [#allocation3], %s184
        %s186 = sand.u32 %s109, 1
        %s187 = smul.addr %s186, 32
        %s188 = scalar_lea.vmem [#allocation2], %s187
        %s189 = smul.u32 2, %s22
        %p190 = scmp.lt.s32.totalorder %s21, 1
        %s191 = scalar_select %p190, %s21, 1
        %p192 = scmp.lt.s32.totalorder %s189, 1
        %s193 = scalar_select %p192, %s189, 1
        %s194 = smul.addr %s191, 2
        %s195 = sadd.s32 %s193, %s194
        %s196 = smul.addr %s195, 8
        %s197 = scalar_lea.vmem %s0, %s196
        %s198 = smul.u32 2, %s22
        %s199 = smul.u32 2, %s22
        %v200 = vld [vmem:[%s197] sm:$0xff]
        %v201 = vld [vmem:[%s197 + $0x8] sm:$0xff]
        %v202 = vld [vmem:[%s1] sm:$0xff]
        %v203 = vld [vmem:[%s1 + $0x8] sm:$0xff]
        %v204 = vld [vmem:[%s2] sm:$0xff]
        %v205 = vld [vmem:[%s2 + $0x8] sm:$0xff]
        %207 = vset.pattern.permute.xlu0 0
        %208 = vperm.xlu0 %207, %v204
        %v209 = vpop.permute.xlu0 %208
        %212 = vset.pattern.permute.xlu0 0
        %213 = vperm.xlu0 %212, %v205
        %v214 = vpop.permute.xlu0 %213
        %vm216 = vcmask 64512
        %v218 = vsel %vm216, %v202, 0
        %v221 = vsel %vm216, %v203, 0
        %223 = vmatprep.subr.mxu0 %v201
        %224 = vmatpush1.msra.mxu0 %v200
        %225 = vmatprep.subr.mxu0 0.0
        %226 = vmatpush1.msra.mxu0 0.0
        %227 = vmatprep.subr.mxu0 0.0
        %228 = vmatpush1.msra.mxu0 0.0
        %229 = vmatprep.subr.mxu0 0.0
        %230 = vmatpush1.msra.mxu0 0.0
        %231 = vmatprep.subr.mxu0 0.0
        %232 = vmatpush1.msra.mxu0 0.0
        %233 = vmatprep.subr.mxu0 0.0
        %234 = vmatpush1.msra.mxu0 0.0
        %235 = vmatprep.subr.mxu0 0.0
        %236 = vmatpush1.msra.mxu0 0.0
        %237 = vmatprep.subr.mxu0 0.0
        %238 = vmatpush1.msra.mxu0 0.0
        %239 = vmatprep.subr.mxu0 0.0
        %240 = vmatpush1.msra.mxu0 0.0
        %241 = vmatprep.subr.mxu0 0.0
        %242 = vmatpush1.msra.mxu0 0.0
        %243 = vmatprep.subr.mxu0 0.0
        %244 = vmatpush1.msra.mxu0 0.0
        %245 = vmatprep.subr.mxu0 0.0
        %246 = vmatpush1.msra.mxu0 0.0
        %247 = vmatprep.subr.mxu0 0.0
        %248 = vmatpush1.msra.mxu0 0.0
        %249 = vmatprep.subr.mxu0 0.0
        %250 = vmatpush1.msra.mxu0 0.0
        %251 = vmatprep.subr.mxu0 0.0
        %252 = vmatpush1.msra.mxu0 0.0
        %253 = vmatprep.subr.mxu0 0.0
        %254 = vmatpush1.msra.mxu0 0.0
        %255 = vmatprep.subr.mxu0 0.0
        %256 = vmatpush1.msra.mxu0 0.0
        %257 = vmatprep.subr.mxu0 0.0
        %258 = vmatpush1.msra.mxu0 0.0
        %259 = vmatprep.subr.mxu0 0.0
        %260 = vmatpush1.msra.mxu0 0.0
        %261 = vmatprep.subr.mxu0 0.0
        %262 = vmatpush1.msra.mxu0 0.0
        %263 = vmatprep.subr.mxu0 0.0
        %264 = vmatpush1.msra.mxu0 0.0
        %265 = vmatprep.subr.mxu0 0.0
        %266 = vmatpush1.msra.mxu0 0.0
        %267 = vmatprep.subr.mxu0 0.0
        %268 = vmatpush1.msra.mxu0 0.0
        %269 = vmatprep.subr.mxu0 0.0
        %270 = vmatpush1.msra.mxu0 0.0
        %271 = vmatprep.subr.mxu0 0.0
        %272 = vmatpush1.msra.mxu0 0.0
        %273 = vmatprep.subr.mxu0 0.0
        %274 = vmatpush1.msra.mxu0 0.0
        %275 = vmatprep.subr.mxu0 0.0
        %276 = vmatpush1.msra.mxu0 0.0
        %277 = vmatprep.subr.mxu0 0.0
        %278 = vmatpush1.msra.mxu0 0.0
        %279 = vmatprep.subr.mxu0 0.0
        %280 = vmatpush1.msra.mxu0 0.0
        %281 = vmatprep.subr.mxu0 0.0
        %282 = vmatpush1.msra.mxu0 0.0
        %283 = vmatprep.subr.mxu0 0.0
        %284 = vmatpush1.msra.mxu0 0.0
        %285 = vmatprep.subr.mxu0 0.0
        %286 = vmatpush1.msra.mxu0 0.0
        %287 = vmatprep.mubr.f32.mxu0 0.0
        %288 = vmatmul.mubr.f32.gmra.mrb[0].mxu0 %v218
        %v289 = vpop.f32.mrb[0].mxu0
        %v290 = vadd.f32 %v209, %v289
        %v291 = vpop.f32.mrb[0].mxu0
        %v292 = vadd.f32 %v209, %v291
        %293 = vmatprep.mubr.f32.mxu0 0.0
        %294 = vmatmul.mubr.f32.gmra.mrb[0].mxu0 %v221
        %v295 = vpop.f32.mrb[0].mxu0
        %v296 = vadd.f32 %v214, %v295
        %v297 = vpop.f32.mrb[0].mxu0
        %v298 = vadd.f32 %v214, %v297
        %299 = vdwg.mxu0
        %300 = vst [vmem:[%s188] sm:$0xff] %v290
        %301 = vst [vmem:[%s188 + $0x8] sm:$0xff] %v292
        %302 = vst [vmem:[%s188 + $0x10] sm:$0xff] %v296
        %303 = vst [vmem:[%s188 + $0x18] sm:$0xff] %v298
        %s304 = sand.u32 %s109, 1
        %s305 = scalar_lea.sflag [#allocation3], %s304
        %s306 = sand.u32 %s109, 1
        %s307 = smul.addr %s306, 32
        %s308 = scalar_lea.vmem [#allocation2], %s307
        // Predicated region
        $region33: #{tpu_custom_call.1} parent=31 // pred_check
          %p309 = pneg %p119
        $region34: #{tpu_custom_call.1} parent=31 // pred_check_branch
          %311 = sbr.rel (%p309) target = $region36
        $region35: #{tpu_custom_call.1} parent=31 // pred_region
          %s312 = smul.u32 2, %s22
          %s314 = ssub.s32 512, 512
          %315 = vsyncadd %s305, %s314
          %s316 = smul.addr %s21, 4
          %s317 = sadd.s32 %s312, %s316
          %s318 = smul.addr %s317, 128
          %s319 = scalar_lea.hbm %s3, %s318
          %s320 = sshll.u32 %s308, 4
          %s321 = int_to_ptr.vmem [resolvable:$true] %s320
          %326 = dma.vmem_to_hbm [thread:$0]  %s321, 512, %s319, %s305, 256, 256, 16
        $region36: #{tpu_custom_call.1} parent=31 // pred_fallthru
          _
      $region32: #{tpu_custom_call.1} parent=5 // pred_fallthru
        _
      %p327 = scmp.le.s32.totalorder 2, %s12
      // Predicated region
      $region37: #{tpu_custom_call.1} parent=5 // pred_check
        %p328 = pneg %p327
      $region38: #{tpu_custom_call.1} parent=5 // pred_check_branch
        %330 = sbr.rel (%p328) target = $region40
      $region39: #{tpu_custom_call.1} parent=5 // pred_region
        %s331 = ssub.s32 %s12, 2
        // Predicated region
        $region41: #{tpu_custom_call.1} parent=39 // pred_check
          %p332 = pneg %p125
        $region42: #{tpu_custom_call.1} parent=39 // pred_check_branch
          %334 = sbr.rel (%p332) target = $region44
        $region43: #{tpu_custom_call.1} parent=39 // pred_region
          %s335 = sand.u32 %s110, 1
          %s336 = scalar_lea.sflag [#allocation3], %s335
          %s337 = sand.u32 %s110, 1
          %s338 = smul.addr %s337, 32
          %s339 = scalar_lea.vmem [#allocation2], %s338
          %340 = dma.done %s336, 512
        $region44: #{tpu_custom_call.1} parent=39 // pred_fallthru
          _
      $region40: #{tpu_custom_call.1} parent=5 // pred_fallthru
        _
    $region6: #{tpu_custom_call.1} parent=1 // loop_footer
      %s16 = sadd.s32 1, %s12
    $region7: #{tpu_custom_call.1} parent=1 // loop_footer_branch
      %11 = sbr.rel target = $region3
    $region8: #{tpu_custom_call.1} parent=1 // loop_exit
      _
    %341 = vsyncpa [#allocation3], 1
    %s342 = scalar_lea.sflag [#allocation3], 1
    %343 = vsyncpa %s342, 1

</llo_original>
